<compile_context>
chip_gen: v7x
topology: tpu7x:2x2x1
jax: 0.10.0
libtpu: 0.0.40
codegen_flags: <defaults>
</compile_context>

<pallas_src>
import functools

import jax
import jax.numpy as jnp
from jax.experimental import pallas as pl
from jax.experimental.pallas import tpu as pltpu

# Block config (typical AttGAN decoder block)
N_IN, N_OUT = 4, 8
KSIZE, STRIDE, PAD = 4, 2, 1
EPS = 1e-5  # BatchNorm2d default eps


def convt_bn_relu_kernel(w_ref, p_ref, gb_ref, o_ref,
                         sum_ref, ssq_ref, scale_ref, shift_ref, *, inv_m):
    """grid = (pass, phase, m_tile).

    pass 0: conv + BN statistics accumulation (no output writes at all)
    pass 1: conv + fused BatchNorm + ReLU -> output
    """
    pas = pl.program_id(0)
    ph = pl.program_id(1)
    mt = pl.program_id(2)
    last_ph = pl.num_programs(1) - 1
    last_mt = pl.num_programs(2) - 1

    # (Cout, 4*Cin) @ (4*Cin, TILE_M) on the MXU: bf16 operands, f32 accumulation.
    conv = jnp.dot(w_ref[...], p_ref[...], preferred_element_type=jnp.float32)

    @pl.when((pas == 0) & (ph == 0) & (mt == 0))
    def _init():
        sum_ref[...] = jnp.zeros_like(sum_ref)
        ssq_ref[...] = jnp.zeros_like(ssq_ref)

    @pl.when(pas == 0)
    def _accumulate():
        # Single-pass BN statistics: per-channel sum and sum of squares (XLU lane
        # reductions; MXU/VPU slots stay free).
        sum_ref[...] += jnp.sum(conv, axis=1, keepdims=True)
        ssq_ref[...] += jnp.sum(conv * conv, axis=1, keepdims=True)

    @pl.when((pas == 0) & (ph == last_ph) & (mt == last_mt))
    def _finalize_stats():
        mean = sum_ref[...] * inv_m
        var = ssq_ref[...] * inv_m - mean * mean          # biased, as nn.BatchNorm2d
        gamma = gb_ref[:, 0:1]
        beta = gb_ref[:, 1:2]
        scale = gamma * jax.lax.rsqrt(var + EPS)
        scale_ref[...] = scale
        shift_ref[...] = beta - mean * scale

    @pl.when(pas == 1)
    def _normalize():
        o_ref[...] = jnp.maximum(conv * scale_ref[...] + shift_ref[...], 0.0)


def _subpixel_patches(x, w_t):
    """Decompose the s=2 / k=4 / p=1 transposed conv into 4 dense sub-convolutions.

    Phase p = 2*po + pw produces output pixels (2*i + po, 2*j + pw).  Each phase only
    ever touches a 2x2 subset of the kernel taps, so the patches contain NO structural
    zeros (unlike input-dilation im2col).

    Returns:
      patches: (4, 4*Cin, N*H*W)  bf16
      wmat:    (4, Cout, 4*Cin)   bf16
    """
    n, cin, h, w = x.shape
    # Equivalent direct-conv weight: flip spatial taps, swap in/out channels.
    w_flip = jnp.flip(w_t, axis=(2, 3)).transpose(1, 0, 2, 3)      # (Cout, Cin, k, k)
    x_p = jnp.pad(x, ((0, 0), (0, 0), (1, 1), (1, 1)))             # 1-px halo is all we need
    patches, wmats = [], []
    for po in range(2):
        for pw in range(2):
            taps, wts = [], []
            for a in range(2):
                for b in range(2):
                    taps.append(x_p[:, :, po + a:po + a + h, pw + b:pw + b + w])
                    wts.append(w_flip[:, :, po + 2 * a, pw + 2 * b])   # (Cout, Cin)
            t = jnp.stack(taps, axis=1)                                # (N, 4, Cin, H, W)
            t = t.reshape(n, 4 * cin, h * w).transpose(1, 0, 2).reshape(4 * cin, n * h * w)
            patches.append(t)
            wmats.append(jnp.concatenate(wts, axis=1))                 # (Cout, 4*Cin)
    return (jnp.stack(patches, 0).astype(jnp.bfloat16),
            jnp.stack(wmats, 0).astype(jnp.bfloat16))


def _pick_tile_m(m, cap=1024):
    """Largest multiple of 128 that divides m and is <= cap (VMEM headroom)."""
    for cand in range(cap, 127, -128):
        if m % cand == 0:
            return cand
    return 128


def conv_transpose2d_block(x, w_t, gamma, beta):
    """x: (N, Cin, H, W) NCHW; w_t: (Cin, Cout, 4, 4) (PyTorch ConvTranspose2d layout)."""
    assert (KSIZE, STRIDE, PAD) == (4, 2, 1), "sub-pixel decomposition assumes k=4, s=2, p=1"
    n, cin, h, w = x.shape
    cout = w_t.shape[1]

    patches, wmat = _subpixel_patches(x, w_t)
    kk = 4 * cin                 # contraction size per phase
    m = n * h * w                # flattened batch*spatial per phase (lane axis)
    assert m % 128 == 0, "demo wrapper assumes lane-dense M; pad/mask for other shapes"

    # Biggest lane-dense tile that divides M; the 1024 cap keeps the double-buffered
    # patch blocks comfortably inside the scoped VMEM limit even for wide decoder
    # layers (halve the cap for v7x's 64 MiB VMEM if kk gets large).
    tile_m = _pick_tile_m(m)
    n_phase = 4
    m_total = float(n_phase * m)            # = N * H_out * W_out elements per channel

    gb = jnp.stack([gamma, beta], axis=1).astype(jnp.float32)   # (Cout, 2), one tiny DMA

    grid = (2, n_phase, m // tile_m)        # (pass, phase, M tile)
    out = pl.pallas_call(
        functools.partial(convt_bn_relu_kernel, inv_m=1.0 / m_total),
        out_shape=jax.ShapeDtypeStruct((n_phase, cout, m), jnp.float32),
        grid_spec=pltpu.PrefetchScalarGridSpec(
            num_scalar_prefetch=0,
            grid=grid,
            in_specs=[
                pl.BlockSpec((None, cout, kk), lambda s, p, t: (p, 0, 0)),
                pl.BlockSpec((None, kk, tile_m), lambda s, p, t: (p, 0, t)),
                pl.BlockSpec((cout, 2), lambda s, p, t: (0, 0)),
            ],
            # Pass 0 (s == 0) pins every step to output block (0, 0, 0) -- the same
            # block the first pass-1 step writes -- so the block index never changes
            # during the stats pass and Pallas emits NO output write-backs for it.
            # Pass 1 (s == 1) sweeps the blocks normally; every block is written
            # exactly once before its (single) write-back.
            out_specs=pl.BlockSpec((None, cout, tile_m),
                                   lambda s, p, t: (s * p, 0, s * t)),
            scratch_shapes=[pltpu.VMEM((cout, 1), jnp.float32) for _ in range(4)],
        ),
        compiler_params=pltpu.CompilerParams(
            # BatchNorm is a global reduction through shared scratch -> every axis
            # must be sequential ("arbitrary"); parallel semantics would shard the
            # accumulator across TensorCores and break the statistics.
            dimension_semantics=("arbitrary", "arbitrary", "arbitrary"),
            vmem_limit_bytes=32 * 1024 * 1024,
        ),
    )(wmat, patches, gb)

    # Pixel-shuffle the 4 phases back into NCHW.
    # TODO(synk): in a fused decoder, fold this layout pass into the consumer (or emit
    # NHWC / keep the phase-major slab) instead of a standalone XLA transpose.
    o = out.reshape(2, 2, cout, n, h, w)        # (po, pw, co, n, i, j)
    o = o.transpose(3, 2, 4, 0, 5, 1)           # (n, co, i, po, j, pw)
    return o.reshape(n, cout, 2 * h, 2 * w)


def _reference(x, w_t, gamma, beta):
    """Pure-JAX f32 reference of the same forward pass (for validation)."""
    k, s, p = KSIZE, STRIDE, PAD
    w_conv = jnp.flip(w_t, axis=(2, 3)).transpose(1, 0, 2, 3)
    conv = jax.lax.conv_general_dilated(
        x, w_conv, window_strides=(1, 1),
        padding=[(k - 1 - p, k - 1 - p), (k - 1 - p, k - 1 - p)],
        lhs_dilation=(s, s),
        dimension_numbers=("NCHW", "OIHW", "NCHW"))
    mean = conv.mean(axis=(0, 2, 3), keepdims=True)
    var = ((conv - mean) ** 2).mean(axis=(0, 2, 3), keepdims=True)
    y = (conv - mean) / jnp.sqrt(var + EPS)
    y = y * gamma.reshape(1, -1, 1, 1) + beta.reshape(1, -1, 1, 1)
    return jnp.maximum(y, 0.0)


if __name__ == "__main__":
    key = jax.random.PRNGKey(0)
    kx, kw, kg, kb = jax.random.split(key, 4)

    # Small shapes consistent with the module: N=2, Cin=4, H=W=16 -> output (2, 8, 32, 32)
    x = jax.random.normal(kx, (2, N_IN, 16, 16), dtype=jnp.float32)
    # ConvTranspose2d weight: (n_in, n_out, kH, kW); no bias (norm_fn == 'batchnorm')
    w_t = 0.05 * jax.random.normal(kw, (N_IN, N_OUT, KSIZE, KSIZE), dtype=jnp.float32)
    # Non-trivial BatchNorm affine params to exercise the fused scale/shift path.
    gamma = 1.0 + 0.2 * jax.random.normal(kg, (N_OUT,), dtype=jnp.float32)
    beta = 0.1 * jax.random.normal(kb, (N_OUT,), dtype=jnp.float32)

    out = jax.block_until_ready(conv_transpose2d_block(x, w_t, gamma, beta))

    ref = _reference(x, w_t, gamma, beta)
    assert out.shape == (2, N_OUT, 32, 32), out.shape
    # bf16 MXU operands + single-pass variance -> small drift vs the f32 reference.
    max_err = float(jnp.max(jnp.abs(out - ref)))
    assert jnp.allclose(out, ref, atol=3e-2, rtol=3e-2), f"mismatch vs reference: {max_err}"

    print("KERNEL_OK")
</pallas_src>

<mosaic_0001>
module attributes {stable_mosaic.version = 11 : i64} {
  func.func @convt_bn_relu_kernel(%arg0: i32, %arg1: i32, %arg2: i32, %arg3: memref<1x8x16xbf16, #tpu.memory_space<vmem>>, %arg4: memref<1x16x512xbf16, #tpu.memory_space<vmem>>, %arg5: memref<8x2xf32, #tpu.memory_space<vmem>>, %arg6: memref<1x8x512xf32, #tpu.memory_space<vmem>>, %arg7: memref<8x1xf32, #tpu.memory_space<vmem>>, %arg8: memref<8x1xf32, #tpu.memory_space<vmem>>, %arg9: memref<8x1xf32, #tpu.memory_space<vmem>>, %arg10: memref<8x1xf32, #tpu.memory_space<vmem>>) attributes {dimension_semantics = [#tpu.dimension_semantics<arbitrary>, #tpu.dimension_semantics<arbitrary>, #tpu.dimension_semantics<arbitrary>], iteration_bounds = array<i64: 2, 4, 1>, scalar_prefetch = 0 : i64, scratch_operands = 4 : i64, tpu.core_type = #tpu.core_type<tc>, window_params = [{transform_indices = @transform_0, window_bounds = array<i64: 1, 8, 16>}, {transform_indices = @transform_1, window_bounds = array<i64: 1, 16, 512>}, {pipeline_mode = #tpu.pipeline_mode<synchronous>, transform_indices = @transform_2, window_bounds = array<i64: 8, 2>}, {transform_indices = @transform_3, window_bounds = array<i64: 1, 8, 512>}]} {
    %c0 = arith.constant 0 : index
    %c0_0 = arith.constant 0 : index
    %c0_1 = arith.constant 0 : index
    %0 = vector.load %arg3[%c0, %c0_0, %c0_1] : memref<1x8x16xbf16, #tpu.memory_space<vmem>>, vector<1x8x16xbf16>
    %1 = vector.shape_cast %0 : vector<1x8x16xbf16> to vector<8x16xbf16>
    %c0_2 = arith.constant 0 : index
    %c0_3 = arith.constant 0 : index
    %c0_4 = arith.constant 0 : index
    %2 = vector.load %arg4[%c0_2, %c0_3, %c0_4] : memref<1x16x512xbf16, #tpu.memory_space<vmem>>, vector<1x16x512xbf16>
    %3 = vector.shape_cast %2 : vector<1x16x512xbf16> to vector<16x512xbf16>
    %cst = arith.constant dense<0.000000e+00> : vector<8x512xf32>
    %4 = tpu.matmul %1, %3, %cst {dimension_numbers = #tpu.dot_dimension_numbers<[1], [0], [0], [1], [0, 0, 1, 1], [], []>} : vector<8x16xbf16>, vector<16x512xbf16>, vector<8x512xf32> -> vector<8x512xf32>
    %c0_i32 = arith.constant 0 : i32
    %5 = arith.cmpi eq, %arg0, %c0_i32 : i32
    %c0_i32_5 = arith.constant 0 : i32
    %6 = arith.cmpi eq, %arg1, %c0_i32_5 : i32
    %7 = arith.andi %5, %6 : i1
    %c0_i32_6 = arith.constant 0 : i32
    %8 = arith.cmpi eq, %arg2, %c0_i32_6 : i32
    %9 = arith.andi %7, %8 : i1
    %10 = arith.extui %9 : i1 to i32
    %c0_i32_7 = arith.constant 0 : i32
    %11 = arith.cmpi ne, %10, %c0_i32_7 : i32
    scf.if %11 {
      %cst_14 = arith.constant 0.000000e+00 : f32
      %25 = vector.broadcast %cst_14 : f32 to vector<8x1xf32>
      %c0_15 = arith.constant 0 : index
      %c0_16 = arith.constant 0 : index
      %26 = vector.load %arg7[%c0_15, %c0_16] : memref<8x1xf32, #tpu.memory_space<vmem>>, vector<8x1xf32>
      tpu.vector_store %arg7[%c0_15, %c0_16], %25 {strides = array<i32>} : memref<8x1xf32, #tpu.memory_space<vmem>>, vector<8x1xf32>,
      %cst_17 = arith.constant 0.000000e+00 : f32
      %27 = vector.broadcast %cst_17 : f32 to vector<8x1xf32>
      %c0_18 = arith.constant 0 : index
      %c0_19 = arith.constant 0 : index
      %28 = vector.load %arg8[%c0_18, %c0_19] : memref<8x1xf32, #tpu.memory_space<vmem>>, vector<8x1xf32>
      tpu.vector_store %arg8[%c0_18, %c0_19], %27 {strides = array<i32>} : memref<8x1xf32, #tpu.memory_space<vmem>>, vector<8x1xf32>,
    } else {
    }
    %c0_i32_8 = arith.constant 0 : i32
    %12 = arith.cmpi eq, %arg0, %c0_i32_8 : i32
    %13 = arith.extui %12 : i1 to i32
    %c0_i32_9 = arith.constant 0 : i32
    %14 = arith.cmpi ne, %13, %c0_i32_9 : i32
    scf.if %14 {
      %c0_14 = arith.constant 0 : index
      %c0_15 = arith.constant 0 : index
      %25 = vector.load %arg7[%c0_14, %c0_15] : memref<8x1xf32, #tpu.memory_space<vmem>>, vector<8x1xf32>
      %cst_16 = arith.constant dense<0.000000e+00> : vector<8xf32>
      %26 = vector.multi_reduction <add>, %4, %cst_16 [1] : vector<8x512xf32> to vector<8xf32>
      %27 = vector.shape_cast %26 : vector<8xf32> to vector<8x1xf32>
      %28 = arith.addf %25, %27 : vector<8x1xf32>
      %c0_17 = arith.constant 0 : index
      %c0_18 = arith.constant 0 : index
      %29 = vector.load %arg7[%c0_17, %c0_18] : memref<8x1xf32, #tpu.memory_space<vmem>>, vector<8x1xf32>
      tpu.vector_store %arg7[%c0_17, %c0_18], %28 {strides = array<i32>} : memref<8x1xf32, #tpu.memory_space<vmem>>, vector<8x1xf32>,
      %c0_19 = arith.constant 0 : index
      %c0_20 = arith.constant 0 : index
      %30 = vector.load %arg8[%c0_19, %c0_20] : memref<8x1xf32, #tpu.memory_space<vmem>>, vector<8x1xf32>
      %31 = arith.mulf %4, %4 : vector<8x512xf32>
      %cst_21 = arith.constant dense<0.000000e+00> : vector<8xf32>
      %32 = vector.multi_reduction <add>, %31, %cst_21 [1] : vector<8x512xf32> to vector<8xf32>
      %33 = vector.shape_cast %32 : vector<8xf32> to vector<8x1xf32>
      %34 = arith.addf %30, %33 : vector<8x1xf32>
      %c0_22 = arith.constant 0 : index
      %c0_23 = arith.constant 0 : index
      %35 = vector.load %arg8[%c0_22, %c0_23] : memref<8x1xf32, #tpu.memory_space<vmem>>, vector<8x1xf32>
      tpu.vector_store %arg8[%c0_22, %c0_23], %34 {strides = array<i32>} : memref<8x1xf32, #tpu.memory_space<vmem>>, vector<8x1xf32>,
    } else {
    }
    %c0_i32_10 = arith.constant 0 : i32
    %15 = arith.cmpi eq, %arg0, %c0_i32_10 : i32
    %c3_i32 = arith.constant 3 : i32
    %16 = arith.cmpi eq, %arg1, %c3_i32 : i32
    %17 = arith.andi %15, %16 : i1
    %c0_i32_11 = arith.constant 0 : i32
    %18 = arith.cmpi eq, %arg2, %c0_i32_11 : i32
    %19 = arith.andi %17, %18 : i1
    %20 = arith.extui %19 : i1 to i32
    %c0_i32_12 = arith.constant 0 : i32
    %21 = arith.cmpi ne, %20, %c0_i32_12 : i32
    scf.if %21 {
      %c0_14 = arith.constant 0 : index
      %c0_15 = arith.constant 0 : index
      %25 = vector.load %arg7[%c0_14, %c0_15] : memref<8x1xf32, #tpu.memory_space<vmem>>, vector<8x1xf32>
      %cst_16 = arith.constant 4.8828125E-4 : f32
      %26 = vector.broadcast %cst_16 : f32 to vector<8x1xf32>
      %27 = arith.mulf %25, %26 : vector<8x1xf32>
      %c0_17 = arith.constant 0 : index
      %c0_18 = arith.constant 0 : index
      %28 = vector.load %arg8[%c0_17, %c0_18] : memref<8x1xf32, #tpu.memory_space<vmem>>, vector<8x1xf32>
      %cst_19 = arith.constant 4.8828125E-4 : f32
      %29 = vector.broadcast %cst_19 : f32 to vector<8x1xf32>
      %30 = arith.mulf %28, %29 : vector<8x1xf32>
      %31 = arith.mulf %27, %27 : vector<8x1xf32>
      %32 = arith.subf %30, %31 : vector<8x1xf32>
      %c0_20 = arith.constant 0 : index
      %c0_21 = arith.constant 0 : index
      %33 = vector.load %arg5[%c0_20, %c0_21] : memref<8x2xf32, #tpu.memory_space<vmem>>, vector<8x1xf32>
      %c0_22 = arith.constant 0 : index
      %c1 = arith.constant 1 : index
      %34 = vector.load %arg5[%c0_22, %c1] : memref<8x2xf32, #tpu.memory_space<vmem>>, vector<8x1xf32>
      %cst_23 = arith.constant 9.99999974E-6 : f32
      %35 = vector.broadcast %cst_23 : f32 to vector<8x1xf32>
      %36 = arith.addf %32, %35 : vector<8x1xf32>
      %37 = math.rsqrt %36 : vector<8x1xf32>
      %38 = arith.mulf %33, %37 : vector<8x1xf32>
      %c0_24 = arith.constant 0 : index
      %c0_25 = arith.constant 0 : index
      %39 = vector.load %arg9[%c0_24, %c0_25] : memref<8x1xf32, #tpu.memory_space<vmem>>, vector<8x1xf32>
      tpu.vector_store %arg9[%c0_24, %c0_25], %38 {strides = array<i32>} : memref<8x1xf32, #tpu.memory_space<vmem>>, vector<8x1xf32>,
      %40 = arith.mulf %27, %38 : vector<8x1xf32>
      %41 = arith.subf %34, %40 : vector<8x1xf32>
      %c0_26 = arith.constant 0 : index
      %c0_27 = arith.constant 0 : index
      %42 = vector.load %arg10[%c0_26, %c0_27] : memref<8x1xf32, #tpu.memory_space<vmem>>, vector<8x1xf32>
      tpu.vector_store %arg10[%c0_26, %c0_27], %41 {strides = array<i32>} : memref<8x1xf32, #tpu.memory_space<vmem>>, vector<8x1xf32>,
    } else {
    }
    %c1_i32 = arith.constant 1 : i32
    %22 = arith.cmpi eq, %arg0, %c1_i32 : i32
    %23 = arith.extui %22 : i1 to i32
    %c0_i32_13 = arith.constant 0 : i32
    %24 = arith.cmpi ne, %23, %c0_i32_13 : i32
    scf.if %24 {
      %c0_14 = arith.constant 0 : index
      %c0_15 = arith.constant 0 : index
      %25 = vector.load %arg9[%c0_14, %c0_15] : memref<8x1xf32, #tpu.memory_space<vmem>>, vector<8x1xf32>
      %26 = vector.broadcast %25 : vector<8x1xf32> to vector<8x512xf32>
      %27 = arith.mulf %4, %26 : vector<8x512xf32>
      %c0_16 = arith.constant 0 : index
      %c0_17 = arith.constant 0 : index
      %28 = vector.load %arg10[%c0_16, %c0_17] : memref<8x1xf32, #tpu.memory_space<vmem>>, vector<8x1xf32>
      %29 = vector.broadcast %28 : vector<8x1xf32> to vector<8x512xf32>
      %30 = arith.addf %27, %29 : vector<8x512xf32>
      %cst_18 = arith.constant 0.000000e+00 : f32
      %31 = vector.broadcast %cst_18 : f32 to vector<8x512xf32>
      %32 = arith.maximumf %30, %31 : vector<8x512xf32>
      %c0_19 = arith.constant 0 : index
      %c0_20 = arith.constant 0 : index
      %c0_21 = arith.constant 0 : index
      %33 = vector.load %arg6[%c0_19, %c0_20, %c0_21] : memref<1x8x512xf32, #tpu.memory_space<vmem>>, vector<1x8x512xf32>
      %34 = vector.shape_cast %33 : vector<1x8x512xf32> to vector<8x512xf32>
      %35 = vector.shape_cast %32 : vector<8x512xf32> to vector<1x8x512xf32>
      tpu.vector_store %arg6[%c0_19, %c0_20, %c0_21], %35 {strides = array<i32>} : memref<1x8x512xf32, #tpu.memory_space<vmem>>, vector<1x8x512xf32>,
    } else {
    }
    return
  }
  func.func @transform_0(%arg0: i32, %arg1: i32, %arg2: i32) -> (i32, i32, i32) {
    %c0_i32 = arith.constant 0 : i32
    %c0_i32_0 = arith.constant 0 : i32
    %c0_i32_1 = arith.constant 0 : i32
    return %arg1, %c0_i32, %c0_i32_0 : i32, i32, i32
  }
  func.func @transform_1(%arg0: i32, %arg1: i32, %arg2: i32) -> (i32, i32, i32) {
    %c0_i32 = arith.constant 0 : i32
    %c0_i32_0 = arith.constant 0 : i32
    return %arg1, %c0_i32, %arg2 : i32, i32, i32
  }
  func.func @transform_2(%arg0: i32, %arg1: i32, %arg2: i32) -> (i32, i32) {
    %c0_i32 = arith.constant 0 : i32
    %c0_i32_0 = arith.constant 0 : i32
    %c0_i32_1 = arith.constant 0 : i32
    return %c0_i32, %c0_i32_0 : i32, i32
  }
  func.func @transform_3(%arg0: i32, %arg1: i32, %arg2: i32) -> (i32, i32, i32) {
    %0 = arith.muli %arg0, %arg1 : i32
    %1 = arith.muli %arg0, %arg2 : i32
    %c0_i32 = arith.constant 0 : i32
    %c0_i32_0 = arith.constant 0 : i32
    return %0, %c0_i32, %1 : i32, i32, i32
  }
}

</mosaic_0001>

<llo_original>
// kernel: tpu_custom_call.1
$region0: #{tpu_custom_call.1}
  #allocation0 [shape = 'u32[]', space=smem, size = 0x4, offset = 0x4, fixed_abs, tag = 'smem constant byte address 0x4 - core index']
  #allocation1 [shape = 'u32[144,128]{1,0:T(1,128)}', space=vmem, size = 0x12000, scoped, tag = 'internal scratch']
  #allocation2 [shape = 'f32[8,1]{1,0:T(8,128)}', space=vmem, size = 0x1000, scoped, tag = 'scratch operand']
  #allocation3 [shape = 'f32[8,1]{1,0:T(8,128)}', space=vmem, size = 0x1000, scoped, tag = 'scratch operand']
  #allocation4 [shape = 'f32[8,1]{1,0:T(8,128)}', space=vmem, size = 0x1000, scoped, tag = 'scratch operand']
  #allocation5 [shape = 'f32[8,1]{1,0:T(8,128)}', space=vmem, size = 0x1000, scoped, tag = 'scratch operand']
  %s0 = inlined_call_operand.hbm [shape: bf16[4,8,16], index: 0, kind: input, shape index: {}]
  %s1 = inlined_call_operand.hbm [shape: bf16[4,16,512], index: 1, kind: input, shape index: {}]
  %s2 = inlined_call_operand.vmem [shape: f32[8,2], index: 2, kind: input, shape index: {}]
  %s3 = inlined_call_operand.hbm [shape: f32[4,8,512], index: 3, kind: output, shape index: {}]
  %s4 = sld [smem:[#allocation0]]
  $region69: #{tpu_custom_call.1} parent=0
    _
  %s6 = ssub.s32 1, %s4
  %s7 = scalar_select 0, %s6, %s4
  $region1: #{tpu_custom_call.1} parent=0
    #allocation6 [shape = 'u8[4096]{0}', space=vmem, size = 0x1000, scoped, tag = 'input window, operand 0']
    #allocation7 [shape = 's32[2]{0}', space=sflag, size = 0x8, scoped, tag = 'scoped memory for tpu_custom_call.1']
    #allocation8 [shape = 's32[2]{0}', space=sflag, size = 0x8, scoped, tag = 'scoped memory for tpu_custom_call.1']
    #allocation9 [shape = 'u8[32768]{0}', space=vmem, size = 0x8000, scoped, tag = 'input window, operand 1']
    #allocation10 [shape = 's32[2]{0}', space=sflag, size = 0x8, scoped, tag = 'scoped memory for tpu_custom_call.1']
    #allocation11 [shape = 'u8[32768]{0}', space=vmem, size = 0x8000, scoped, tag = 'output window, operand 0']
    %8 = vsyncpa [#allocation7], 0
    %s9 = scalar_lea.sflag [#allocation7], 1
    %10 = vsyncpa %s9, 0
    %11 = vsyncpa [#allocation10], 0
    %s12 = scalar_lea.sflag [#allocation10], 1
    %13 = vsyncpa %s12, 0
    %14 = vsyncpa [#allocation8], 0
    %s15 = scalar_lea.sflag [#allocation8], 1
    %16 = vsyncpa %s15, 0
    loop: start=0, step=1, limit=10
    $region2: #{tpu_custom_call.1} parent=1 // loop_pre_header
      _
    $region3: #{tpu_custom_call.1} parent=1 // loop_header
      %s18 = sphi 0, %s22
      %p19 = scmp.ge.s32.totalorder %s18, 10
      %s25 = sphi 0, %s44
      %s26 = sphi 0, %s40
      %s27 = sphi 0, %s36
      %s28 = sphi 0, %s25
      %s29 = sphi 0, %s26
      %s30 = sphi 0, %s27
      %s31 = sphi 0, %s28
      %s32 = sphi 0, %s29
      %s33 = sphi 0, %s30
      %s47 = sphi 0, %s49
      %s50 = sphi 0, %s47
      %s51 = sphi 0, %s50
      %s67 = sphi 0, %s51
      %s75 = sphi 0, %s77
      %s78 = sphi 0, %s75
      %s79 = sphi 0, %s78
      %s95 = sphi 0, %s79
      %s99 = sphi 0, %s99
      %s101 = sphi 0, %s99
      %s102 = sphi 0, %s101
      %s116 = sphi 0, %s102
      %s128 = sphi 0, %s130
      %s131 = sphi 0, %s128
      %s132 = sphi 0, %s131
      %s148 = sphi 0, %s132
    $region4: #{tpu_custom_call.1} parent=1 // loop_header_branch
      %21 = sbr.rel (%p19) target = $region8
    $region5: #{tpu_custom_call.1} parent=1 // loop_body
      %s23 = ssub.s32 %s18, 1
      %s24 = ssub.s32 %s18, 2
      %s34 = sadd.s32 1, %s27
      %p35 = scmp.ge.s32.totalorder %s34, 1
      %s36 = scalar_select %p35, 0, %s34
      %s37 = sadd.s32 1, %s26
      %s38 = scalar_select %p35, %s37, %s26
      %p39 = scmp.ge.s32.totalorder %s38, 4
      %s40 = scalar_select %p39, 0, %s38
      %s41 = sadd.s32 1, %s25
      %s42 = scalar_select %p39, %s41, %s25
      %p43 = scmp.ge.s32.totalorder %s42, 2
      %s44 = scalar_select %p43, 0, %s42
      %s45 = ssub.s32 %s26, %s40
      %p46 = scmp.eq.s32.totalorder %s45, 0
      %s48 = sadd.s32 %s47, 1
      %s49 = scalar_select %p46, %s47, %s48
      %p52 = pneg %p46
      %p53 = scmp.eq.s32.totalorder %s18, 7
      %p54 = por %p52, %p53
      %p55 = scmp.ne.s32.totalorder %s47, %s50
      %p56 = scmp.eq.s32.totalorder %s18, 0
      %p57 = por %p55, %p56
      %p58 = scmp.ne.s32.totalorder %s47, %s50
      %p59 = scmp.eq.s32.totalorder %s23, 7
      %p60 = por %p58, %p59
      %p61 = scmp.ne.s32.totalorder %s50, %s51
      %p62 = scmp.eq.s32.totalorder %s23, 0
      %p63 = por %p61, %p62
      %p64 = scmp.ne.s32.totalorder %s50, %s51
      %p65 = scmp.eq.s32.totalorder %s24, 7
      %p66 = por %p64, %p65
      %p68 = scmp.ne.s32.totalorder %s51, %s67
      %p69 = scmp.eq.s32.totalorder %s24, 0
      %p70 = por %p68, %p69
      %s71 = ssub.s32 %s26, %s40
      %s72 = ssub.s32 %s27, %s36
      %s73 = sor.u32 %s71, %s72
      %p74 = scmp.eq.s32.totalorder %s73, 0
      %s76 = sadd.s32 %s75, 1
      %s77 = scalar_select %p74, %s75, %s76
      %p80 = pneg %p74
      %p81 = scmp.eq.s32.totalorder %s18, 7
      %p82 = por %p80, %p81
      %p83 = scmp.ne.s32.totalorder %s75, %s78
      %p84 = scmp.eq.s32.totalorder %s18, 0
      %p85 = por %p83, %p84
      %p86 = scmp.ne.s32.totalorder %s75, %s78
      %p87 = scmp.eq.s32.totalorder %s23, 7
      %p88 = por %p86, %p87
      %p89 = scmp.ne.s32.totalorder %s78, %s79
      %p90 = scmp.eq.s32.totalorder %s23, 0
      %p91 = por %p89, %p90
      %p92 = scmp.ne.s32.totalorder %s78, %s79
      %p93 = scmp.eq.s32.totalorder %s24, 7
      %p94 = por %p92, %p93
      %p96 = scmp.ne.s32.totalorder %s79, %s95
      %p97 = scmp.eq.s32.totalorder %s24, 0
      %p98 = por %p96, %p97
      %s100 = sadd.s32 %s99, 1
      %p103 = scmp.eq.s32.totalorder %s18, 7
      %p104 = scmp.ne.s32.totalorder %s99, %s101
      %p105 = scmp.eq.s32.totalorder %s18, 0
      %p106 = por %p104, %p105
      %p107 = scmp.ne.s32.totalorder %s99, %s101
      %p108 = scmp.eq.s32.totalorder %s23, 7
      %p109 = por %p107, %p108
      %p110 = scmp.ne.s32.totalorder %s101, %s102
      %p111 = scmp.eq.s32.totalorder %s23, 0
      %p112 = por %p110, %p111
      %p113 = scmp.ne.s32.totalorder %s101, %s102
      %p114 = scmp.eq.s32.totalorder %s24, 7
      %p115 = por %p113, %p114
      %p117 = scmp.ne.s32.totalorder %s102, %s116
      %p118 = scmp.eq.s32.totalorder %s24, 0
      %p119 = por %p117, %p118
      %s120 = smul.u32 %s25, %s26
      %s121 = smul.u32 %s25, %s27
      %s122 = smul.u32 %s44, %s40
      %s123 = smul.u32 %s44, %s36
      %s124 = ssub.s32 %s120, %s122
      %s125 = ssub.s32 %s121, %s123
      %s126 = sor.u32 %s124, %s125
      %p127 = scmp.eq.s32.totalorder %s126, 0
      %s129 = sadd.s32 %s128, 1
      %s130 = scalar_select %p127, %s128, %s129
      %p133 = pneg %p127
      %p134 = scmp.eq.s32.totalorder %s18, 7
      %p135 = por %p133, %p134
      %p136 = scmp.ne.s32.totalorder %s128, %s131
      %p137 = scmp.eq.s32.totalorder %s18, 0
      %p138 = por %p136, %p137
      %p139 = scmp.ne.s32.totalorder %s128, %s131
      %p140 = scmp.eq.s32.totalorder %s23, 7
      %p141 = por %p139, %p140
      %p142 = scmp.ne.s32.totalorder %s131, %s132
      %p143 = scmp.eq.s32.totalorder %s23, 0
      %p144 = por %p142, %p143
      %p145 = scmp.ne.s32.totalorder %s131, %s132
      %p146 = scmp.eq.s32.totalorder %s24, 7
      %p147 = por %p145, %p146
      %p149 = scmp.ne.s32.totalorder %s132, %s148
      %p150 = scmp.eq.s32.totalorder %s24, 0
      %p151 = por %p149, %p150
      %p152 = scmp.le.s32.totalorder 1, %s18
      %p153 = scmp.lt.s32.totalorder %s18, 9
      %p154 = pnand %p152, %p153
      %p155 = pneg %p154
      // Predicated region
      $region9: #{tpu_custom_call.1} parent=5 // pred_check
        _
      $region10: #{tpu_custom_call.1} parent=5 // pred_check_branch
        %157 = sbr.rel (%p154) target = $region12
      $region11: #{tpu_custom_call.1} parent=5 // pred_region
        %s158 = ssub.s32 %s18, 1
        // Predicated region
        $region13: #{tpu_custom_call.1} parent=11 // pred_check
          %p159 = pneg %p112
        $region14: #{tpu_custom_call.1} parent=11 // pred_check_branch
          %161 = sbr.rel (%p159) target = $region16
        $region15: #{tpu_custom_call.1} parent=11 // pred_region
          _
        $region16: #{tpu_custom_call.1} parent=11 // pred_fallthru
          _
      $region12: #{tpu_custom_call.1} parent=5 // pred_fallthru
        _
      %p162 = scmp.lt.s32.totalorder %s18, 8
      // Predicated region
      $region17: #{tpu_custom_call.1} parent=5 // pred_check
        %p163 = pneg %p162
      $region18: #{tpu_custom_call.1} parent=5 // pred_check_branch
        %165 = sbr.rel (%p163) target = $region20
      $region19: #{tpu_custom_call.1} parent=5 // pred_region
        // Predicated region
        $region21: #{tpu_custom_call.1} parent=19 // pred_check
          %p166 = pneg %p57
        $region22: #{tpu_custom_call.1} parent=19 // pred_check_branch
          %168 = sbr.rel (%p166) target = $region24
        $region23: #{tpu_custom_call.1} parent=19 // pred_region
          %s169 = sand.u32 %s47, 1
          %s170 = scalar_lea.sflag [#allocation7], %s169
          %s171 = sand.u32 %s47, 1
          %s172 = smul.addr %s171, 4
          %s173 = scalar_lea.vmem [#allocation6], %s172
          %s175 = ssub.s32 64, 64
          %176 = vsyncadd %s170, %s175
          %s177 = smul.addr %s26, 64
          %s178 = scalar_lea.hbm %s0, %s177
          %s180 = sshll.u32 %s173, 4
          %s181 = int_to_ptr.vmem [resolvable:$true] %s180
          %183 = dma.hbm_to_vmem [thread:$0]  %s178, 64, %s181, %s170
        $region24: #{tpu_custom_call.1} parent=19 // pred_fallthru
          _
        // Predicated region
        $region25: #{tpu_custom_call.1} parent=19 // pred_check
          %p184 = pneg %p85
        $region26: #{tpu_custom_call.1} parent=19 // pred_check_branch
          %186 = sbr.rel (%p184) target = $region28
        $region27: #{tpu_custom_call.1} parent=19 // pred_region
          %s187 = sand.u32 %s75, 1
          %s188 = scalar_lea.sflag [#allocation10], %s187
          %s189 = sand.u32 %s75, 1
          %s190 = smul.addr %s189, 32
          %s191 = scalar_lea.vmem [#allocation9], %s190
          %s192 = smul.u32 4, %s27
          %s194 = ssub.s32 512, 512
          %195 = vsyncadd %s188, %s194
          %s196 = smul.addr %s26, 8
          %s197 = sadd.s32 %s192, %s196
          %s198 = smul.addr %s197, 64
          %s199 = scalar_lea.hbm %s1, %s198
          %s200 = sshll.u32 %s191, 4
          %s201 = int_to_ptr.vmem [resolvable:$true] %s200
          %206 = dma.hbm_to_vmem [thread:$0]  %s199, 512, %s201, %s188, 256, 256, 16
        $region28: #{tpu_custom_call.1} parent=19 // pred_fallthru
          _
      $region20: #{tpu_custom_call.1} parent=5 // pred_fallthru
        _
      %p207 = scmp.le.s32.totalorder 1, %s18
      %p208 = scmp.lt.s32.totalorder %s18, 9
      %p209 = pnand %p207, %p208
      %p210 = pneg %p209
      // Predicated region
      $region29: #{tpu_custom_call.1} parent=5 // pred_check
        _
      $region30: #{tpu_custom_call.1} parent=5 // pred_check_branch
        %212 = sbr.rel (%p209) target = $region32
      $region31: #{tpu_custom_call.1} parent=5 // pred_region
        %s213 = ssub.s32 %s18, 1
        %s214 = sand.u32 %s50, 1
        %s215 = scalar_lea.sflag [#allocation7], %s214
        %s216 = sand.u32 %s50, 1
        %s217 = smul.addr %s216, 4
        %s218 = scalar_lea.vmem [#allocation6], %s217
        // Predicated region
        $region33: #{tpu_custom_call.1} parent=31 // pred_check
          %p219 = pneg %p63
        $region34: #{tpu_custom_call.1} parent=31 // pred_check_branch
          %221 = sbr.rel (%p219) target = $region36
        $region35: #{tpu_custom_call.1} parent=31 // pred_region
          %222 = dma.done %s215, 64
        $region36: #{tpu_custom_call.1} parent=31 // pred_fallthru
          _
        %s223 = sand.u32 %s78, 1
        %s224 = scalar_lea.sflag [#allocation10], %s223
        %s225 = sand.u32 %s78, 1
        %s226 = smul.addr %s225, 32
        %s227 = scalar_lea.vmem [#allocation9], %s226
        // Predicated region
        $region37: #{tpu_custom_call.1} parent=31 // pred_check
          %p228 = pneg %p91
        $region38: #{tpu_custom_call.1} parent=31 // pred_check_branch
          %230 = sbr.rel (%p228) target = $region40
        $region39: #{tpu_custom_call.1} parent=31 // pred_region
          %231 = dma.done %s224, 512
        $region40: #{tpu_custom_call.1} parent=31 // pred_fallthru
          _
        %s232 = sand.u32 %s50, 1
        %s233 = scalar_lea.sflag [#allocation7], %s232
        %s234 = sand.u32 %s50, 1
        %s235 = smul.addr %s234, 4
        %s236 = scalar_lea.vmem [#allocation6], %s235
        %p237 = pneg %p63
        %p238 = pneg %p60
        %s239 = sand.u32 %s78, 1
        %s240 = scalar_lea.sflag [#allocation10], %s239
        %s241 = sand.u32 %s78, 1
        %s242 = smul.addr %s241, 32
        %s243 = scalar_lea.vmem [#allocation9], %s242
        %p244 = pneg %p91
        %p245 = pneg %p88
        %p246 = pneg %p112
        %p247 = pneg %p109
        %p248 = pneg %p144
        %p249 = pneg %p141
        %s250 = sand.u32 %s131, 1
        %s251 = scalar_lea.sflag [#allocation8], %s250
        %s252 = sand.u32 %s131, 1
        %s253 = smul.addr %s252, 32
        %s254 = scalar_lea.vmem [#allocation11], %s253
        %s255 = smul.u32 4, %s30
        %s256 = smul.u32 %s28, %s29
        %s257 = smul.u32 %s28, %s30
        %s258 = smul.u32 4, %s257
        %v260 = vld [vmem:[%s218] sm:$0xf]
        %v261 = vld [vmem:[%s227] sm:$0xff]
        %v262 = vld [vmem:[%s227 + $0x8] sm:$0xff]
        %v263 = vld [vmem:[%s227 + $0x10] sm:$0xff]
        %v264 = vld [vmem:[%s227 + $0x18] sm:$0xff]
        %v269 = vunpack.c.l.b16 %v261
        %v270 = vunpack.c.h.b16 %v261
        %v271 = vunpack.c.l.b16 %v262
        %v272 = vunpack.c.h.b16 %v262
        %v273 = vunpack.c.l.b16 %v263
        %v274 = vunpack.c.h.b16 %v263
        %v275 = vunpack.c.l.b16 %v264
        %v276 = vunpack.c.h.b16 %v264
        %v277 = vpack.c.b16 %v273, %v269
        %v278 = vpack.c.b16 %v274, %v270
        %v279 = vpack.c.b16 %v275, %v271
        %v280 = vpack.c.b16 %v276, %v272
        %vm285 = vcmask 130048
        %v287 = vsel %vm285, %v260, 0
        %289 = vmatprep.subr.bf16.mxu0 %v278
        %290 = vmatpush1.bf16.msra.mxu0 %v277
        %291 = vmatprep.subr.bf16.mxu0 0
        %292 = vmatpush1.bf16.msra.mxu0 0
        %293 = vmatprep.subr.bf16.mxu0 0
        %294 = vmatpush1.bf16.msra.mxu0 0
        %295 = vmatprep.subr.bf16.mxu0 0
        %296 = vmatpush1.bf16.msra.mxu0 0
        %297 = vmatprep.subr.bf16.mxu0 0
        %298 = vmatpush1.bf16.msra.mxu0 0
        %299 = vmatprep.subr.bf16.mxu0 0
        %300 = vmatpush1.bf16.msra.mxu0 0
        %301 = vmatprep.subr.bf16.mxu0 0
        %302 = vmatpush1.bf16.msra.mxu0 0
        %303 = vmatprep.subr.bf16.mxu0 0
        %304 = vmatpush1.bf16.msra.mxu0 0
        %305 = vmatprep.subr.bf16.mxu0 0
        %306 = vmatpush1.bf16.msra.mxu0 0
        %307 = vmatprep.subr.bf16.mxu0 0
        %308 = vmatpush1.bf16.msra.mxu0 0
        %309 = vmatprep.subr.bf16.mxu0 0
        %310 = vmatpush1.bf16.msra.mxu0 0
        %311 = vmatprep.subr.bf16.mxu0 0
        %312 = vmatpush1.bf16.msra.mxu0 0
        %313 = vmatprep.subr.bf16.mxu0 0
        %314 = vmatpush1.bf16.msra.mxu0 0
        %315 = vmatprep.subr.bf16.mxu0 0
        %316 = vmatpush1.bf16.msra.mxu0 0
        %317 = vmatprep.subr.bf16.mxu0 0
        %318 = vmatpush1.bf16.msra.mxu0 0
        %319 = vmatprep.subr.bf16.mxu0 0
        %320 = vmatpush1.bf16.msra.mxu0 0
        %321 = vmatprep.mubr.bf16.mxu0 0
        %322 = vmatmul.mubr.bf16.gmra.mrb[0].mxu0 %v287
        %v323 = vpop.f32.mrb[0].mxu0
        %v324 = vadd.f32 0.0, %v323
        %v325 = vpop.f32.mrb[0].mxu0
        %v326 = vadd.f32 0.0, %v325
        %v327 = vpop.f32.mrb[0].mxu0
        %v328 = vpop.f32.mrb[0].mxu0
        %329 = vdwg.mxu0
        %330 = vmatprep.subr.bf16.mxu0 %v280
        %331 = vmatpush1.bf16.msra.mxu0 %v279
        %332 = vmatprep.subr.bf16.mxu0 0
        %333 = vmatpush1.bf16.msra.mxu0 0
        %334 = vmatprep.subr.bf16.mxu0 0
        %335 = vmatpush1.bf16.msra.mxu0 0
        %336 = vmatprep.subr.bf16.mxu0 0
        %337 = vmatpush1.bf16.msra.mxu0 0
        %338 = vmatprep.subr.bf16.mxu0 0
        %339 = vmatpush1.bf16.msra.mxu0 0
        %340 = vmatprep.subr.bf16.mxu0 0
        %341 = vmatpush1.bf16.msra.mxu0 0
        %342 = vmatprep.subr.bf16.mxu0 0
        %343 = vmatpush1.bf16.msra.mxu0 0
        %344 = vmatprep.subr.bf16.mxu0 0
        %345 = vmatpush1.bf16.msra.mxu0 0
        %346 = vmatprep.subr.bf16.mxu0 0
        %347 = vmatpush1.bf16.msra.mxu0 0
        %348 = vmatprep.subr.bf16.mxu0 0
        %349 = vmatpush1.bf16.msra.mxu0 0
        %350 = vmatprep.subr.bf16.mxu0 0
        %351 = vmatpush1.bf16.msra.mxu0 0
        %352 = vmatprep.subr.bf16.mxu0 0
        %353 = vmatpush1.bf16.msra.mxu0 0
        %354 = vmatprep.subr.bf16.mxu0 0
        %355 = vmatpush1.bf16.msra.mxu0 0
        %356 = vmatprep.subr.bf16.mxu0 0
        %357 = vmatpush1.bf16.msra.mxu0 0
        %358 = vmatprep.subr.bf16.mxu0 0
        %359 = vmatpush1.bf16.msra.mxu0 0
        %360 = vmatprep.subr.bf16.mxu0 0
        %361 = vmatpush1.bf16.msra.mxu0 0
        %362 = vmatprep.mubr.bf16.mxu0 0
        %363 = vmatmul.mubr.bf16.gmra.mrb[0].mxu0 %v287
        %v364 = vpop.f32.mrb[0].mxu0
        %v365 = vadd.f32 0.0, %v364
        %v366 = vpop.f32.mrb[0].mxu0
        %v367 = vadd.f32 0.0, %v366
        %v368 = vpop.f32.mrb[0].mxu0
        %v369 = vpop.f32.mrb[0].mxu0
        %370 = vdwg.mxu0
        %p371 = scmp.eq.s32.totalorder %s28, 0
        %p372 = scmp.eq.s32.totalorder %s29, 0
        %p373 = pnand %p371, %p372
        %p374 = pneg %p373
        %p375 = scmp.eq.s32.totalorder %s30, 0
        %p376 = pnand %p374, %p375
        %p377 = pneg %p376
        // Predicated region
        $region41: #{tpu_custom_call.1} parent=31 // pred_check
          _
        $region42: #{tpu_custom_call.1} parent=31 // pred_check_branch
          %379 = sbr.rel (%p376) target = $region44
        $region43: #{tpu_custom_call.1} parent=31 // pred_region
          %vm380 = vcmask 7168
          %381 = vst.msk [vmem:[#allocation2] sm:$0xff] %vm380, 0.0
          %382 = vst.msk [vmem:[#allocation3] sm:$0xff] %vm380, 0.0
        $region44: #{tpu_custom_call.1} parent=31 // pred_fallthru
          _
        // Predicated region
        $region45: #{tpu_custom_call.1} parent=31 // pred_check
          %p383 = pneg %p371
        $region46: #{tpu_custom_call.1} parent=31 // pred_check_branch
          %385 = sbr.rel (%p383) target = $region48
        $region47: #{tpu_custom_call.1} parent=31 // pred_region
          %v386 = vld [vmem:[#allocation2] sm:$0xff]
          %v387 = vadd.f32 %v324, %v326
          %v388 = vadd.f32 %v387, %v365
          %v389 = vadd.f32 %v388, %v367
          %390 = vadd.xlane.f32.xlu0 %v389
          %v391 = vpop.xlane.xlu0 %390
          %v392 = vadd.f32 %v386, %v391
          %vm393 = vcmask 7168
          %394 = vst.msk [vmem:[#allocation2] sm:$0xff] %vm393, %v392
          %v395 = vld [vmem:[#allocation3] sm:$0xff]
          %v396 = vmul.f32 %v324, %v324
          %v397 = vmul.f32 %v326, %v326
          %v398 = vmul.f32 %v365, %v365
          %v399 = vmul.f32 %v367, %v367
          %v400 = vadd.f32 %v396, %v397
          %v401 = vadd.f32 %v400, %v398
          %v402 = vadd.f32 %v401, %v399
          %403 = vadd.xlane.f32.xlu0 %v402
          %v404 = vpop.xlane.xlu0 %403
          %v405 = vadd.f32 %v395, %v404
          %406 = vst.msk [vmem:[#allocation3] sm:$0xff] %vm393, %v405
        $region48: #{tpu_custom_call.1} parent=31 // pred_fallthru
          _
        %p407 = scmp.eq.s32.totalorder %s29, 3
        %p408 = pnand %p371, %p407
        %p409 = pneg %p408
        %p410 = pnand %p409, %p375
        %p411 = pneg %p410
        // Predicated region
        $region49: #{tpu_custom_call.1} parent=31 // pred_check
          _
        $region50: #{tpu_custom_call.1} parent=31 // pred_check_branch
          %413 = sbr.rel (%p410) target = $region52
        $region51: #{tpu_custom_call.1} parent=31 // pred_region
          %v414 = vld [vmem:[#allocation2] sm:$0xff]
          %v415 = vmul.f32 %v414, 0.00048828125
          %v416 = vld [vmem:[#allocation3] sm:$0xff]
          %v417 = vmul.f32 %v416, 0.00048828125
          %v418 = vmul.f32 %v415, %v415
          %v419 = vsub.f32 %v417, %v418
          %v420 = vld [vmem:[%s2] sm:$0xff]
          %v421 = vadd.f32 %v419, 1e-05
          %v422 = vrsqrt.pop %v421
          %v423 = vmul.f32 %v420, %v422
          %vm424 = vcmask 7168
          %425 = vst.msk [vmem:[#allocation4] sm:$0xff] %vm424, %v423
          %v426 = vmul.f32 %v415, %v423
          %428 = vrot.lane.b32.xlu0 %v426, 1
          %v429 = vpop.permute.xlu0 %428
          %v431 = vsub.f32 %v420, %v429
          %433 = vrot.lane.b32.xlu0 %v431, 127
          %v434 = vpop.permute.xlu0 %433
          %436 = vst.msk [vmem:[#allocation5] sm:$0xff] %vm424, %v434
        $region52: #{tpu_custom_call.1} parent=31 // pred_fallthru
          _
        %p437 = scmp.eq.s32.totalorder %s28, 1
        // Predicated region
        $region53: #{tpu_custom_call.1} parent=31 // pred_check
          %p438 = pneg %p437
        $region54: #{tpu_custom_call.1} parent=31 // pred_check_branch
          %440 = sbr.rel (%p438) target = $region56
        $region55: #{tpu_custom_call.1} parent=31 // pred_region
          %v441 = vld [vmem:[#allocation4] sm:$0xff]
          %443 = vset.pattern.permute.xlu0 0
          %444 = vperm.xlu0 %443, %v441
          %v445 = vpop.permute.xlu0 %444
          %v447 = vmul.f32 %v324, %v445
          %v448 = vmul.f32 %v326, %v445
          %v449 = vmul.f32 %v365, %v445
          %v450 = vmul.f32 %v367, %v445
          %v451 = vld [vmem:[#allocation5] sm:$0xff]
          %453 = vset.pattern.permute.xlu0 0
          %454 = vperm.xlu0 %453, %v451
          %v455 = vpop.permute.xlu0 %454
          %v457 = vadd.f32 %v447, %v455
          %v458 = vadd.f32 %v448, %v455
          %v459 = vadd.f32 %v449, %v455
          %v460 = vadd.f32 %v450, %v455
          %v461 = vmax.f32 %v457, 0.0
          %v462 = vmax.f32 %v458, 0.0
          %v463 = vmax.f32 %v459, 0.0
          %v464 = vmax.f32 %v460, 0.0
          %465 = vst [vmem:[%s254] sm:$0xff] %v461
          %466 = vst [vmem:[%s254 + $0x8] sm:$0xff] %v462
          %467 = vst [vmem:[%s254 + $0x10] sm:$0xff] %v463
          %468 = vst [vmem:[%s254 + $0x18] sm:$0xff] %v464
        $region56: #{tpu_custom_call.1} parent=31 // pred_fallthru
          _
        %s469 = sand.u32 %s131, 1
        %s470 = scalar_lea.sflag [#allocation8], %s469
        %s471 = sand.u32 %s131, 1
        %s472 = smul.addr %s471, 32
        %s473 = scalar_lea.vmem [#allocation11], %s472
        // Predicated region
        $region57: #{tpu_custom_call.1} parent=31 // pred_check
          %p474 = pneg %p141
        $region58: #{tpu_custom_call.1} parent=31 // pred_check_branch
          %476 = sbr.rel (%p474) target = $region60
        $region59: #{tpu_custom_call.1} parent=31 // pred_region
          %s477 = smul.u32 %s28, %s29
          %s478 = smul.u32 %s28, %s30
          %s479 = smul.u32 4, %s478
          %s481 = ssub.s32 512, 512
          %482 = vsyncadd %s470, %s481
          %s483 = smul.addr %s477, 4
          %s484 = sadd.s32 %s479, %s483
          %s485 = smul.addr %s484, 128
          %s486 = scalar_lea.hbm %s3, %s485
          %s488 = sshll.u32 %s473, 4
          %s489 = int_to_ptr.vmem [resolvable:$true] %s488
          %491 = dma.vmem_to_hbm [thread:$0]  %s489, 512, %s486, %s470
        $region60: #{tpu_custom_call.1} parent=31 // pred_fallthru
          _
      $region32: #{tpu_custom_call.1} parent=5 // pred_fallthru
        _
      %p492 = scmp.le.s32.totalorder 2, %s18
      // Predicated region
      $region61: #{tpu_custom_call.1} parent=5 // pred_check
        %p493 = pneg %p492
      $region62: #{tpu_custom_call.1} parent=5 // pred_check_branch
        %495 = sbr.rel (%p493) target = $region64
      $region63: #{tpu_custom_call.1} parent=5 // pred_region
        %s496 = ssub.s32 %s18, 2
        // Predicated region
        $region65: #{tpu_custom_call.1} parent=63 // pred_check
          %p497 = pneg %p147
        $region66: #{tpu_custom_call.1} parent=63 // pred_check_branch
          %499 = sbr.rel (%p497) target = $region68
        $region67: #{tpu_custom_call.1} parent=63 // pred_region
          %s500 = sand.u32 %s132, 1
          %s501 = scalar_lea.sflag [#allocation8], %s500
          %s502 = sand.u32 %s132, 1
          %s503 = smul.addr %s502, 32
          %s504 = scalar_lea.vmem [#allocation11], %s503
          %505 = dma.done %s501, 512
        $region68: #{tpu_custom_call.1} parent=63 // pred_fallthru
          _
      $region64: #{tpu_custom_call.1} parent=5 // pred_fallthru
        _
    $region6: #{tpu_custom_call.1} parent=1 // loop_footer
      %s22 = sadd.s32 1, %s18
    $region7: #{tpu_custom_call.1} parent=1 // loop_footer_branch
      %17 = sbr.rel target = $region3
    $region8: #{tpu_custom_call.1} parent=1 // loop_exit
      _
    %506 = vsyncpa [#allocation7], 1
    %s507 = scalar_lea.sflag [#allocation7], 1
    %508 = vsyncpa %s507, 1
    %509 = vsyncpa [#allocation10], 1
    %s510 = scalar_lea.sflag [#allocation10], 1
    %511 = vsyncpa %s510, 1
    %512 = vsyncpa [#allocation8], 1
    %s513 = scalar_lea.sflag [#allocation8], 1
    %514 = vsyncpa %s513, 1

</llo_original>
